<compile_context>
chip_gen: v7x
topology: tpu7x:2x2x1
jax: 0.10.0
libtpu: 0.0.40
codegen_flags: <defaults>
</compile_context>

<pallas_src>
import jax
import jax.numpy as jnp
from jax.experimental import pallas as pl
from jax.experimental.pallas import tpu as pltpu


def lstm_kernel(x_ref, w_cat_ref, w_lin_ref, b_lin_ref, out_ref):
    """x_ref:     (T*B, 8)  time-major rows (t*B + b); cols [0,4)=features,
                             col 4 = 1.0 (bias column), cols 5..7 = 0.
       w_cat_ref: (H+8, 4H) rows [0,H)=W_hh^T, rows [H,H+8)=W_ih^T|bias|zeros.
                             gate lane blocks [i, f, o, 2*g].
       w_lin_ref: (1, H)    Linear(H,1) weight row.
       b_lin_ref: (1, 1)    Linear bias (SMEM scalar).
       out_ref:   (B, 1)"""
    TB, Fp = x_ref.shape
    H = w_lin_ref.shape[1]
    B = out_ref.shape[0]
    T = TB // B

    w_hh = w_cat_ref[0:H, :]            # (H, 4H)  -- 8-row aligned, 8-row multiple
    w_ihb = w_cat_ref[H:H + Fp, :]      # (8, 4H)  -- W_ih^T + bias row + zero pad

    # Hoisted input projection for all timesteps; bias folds in via the ones column.
    xw = jnp.dot(x_ref[...], w_ihb, preferred_element_type=jnp.float32)   # (T*B, 4H)

    def cell(gates, c):
        # gate lane blocks (reordered at packing time): [i, f, o, g*2]
        s = jax.nn.sigmoid(gates)                      # ONE full-vreg EUP push
        i_g = s[:, 0 * H:1 * H]
        f_g = s[:, 1 * H:2 * H]
        o_g = s[:, 2 * H:3 * H]
        g_g = 2.0 * s[:, 3 * H:4 * H] - 1.0            # tanh(x) = 2*sigmoid(2x) - 1
        c_new = f_g * c + i_g * g_g
        h_new = o_g * jnp.tanh(c_new)
        return h_new, c_new

    # t = 0: h == 0, so the recurrent matmul contributes nothing -> skip it.
    h, c = cell(xw[0:B, :], jnp.zeros((B, H), jnp.float32))

    # Fully unrolled recurrence (T small & static): one (B,H)x(H,4H) dot per step,
    # contiguous static row slice of xw per step.
    for t in range(1, T):
        gates = xw[t * B:(t + 1) * B, :] + jnp.dot(h, w_hh,
                                                   preferred_element_type=jnp.float32)
        h, c = cell(gates, c)

    # Linear(H, 1): VPU mul + lane reduction; bias comes from an SMEM scalar.
    out = jnp.sum(h * w_lin_ref[...], axis=-1, keepdims=True) + b_lin_ref[0, 0]
    out_ref[...] = out.astype(out_ref.dtype)


@jax.jit
def lstm_model_forward(x, w_cat, w_lin, b_lin):
    """x: (B, T, F) batch_first, like the PyTorch module."""
    B, T, F = x.shape
    Fp = 8
    # Time-major flatten so per-step slices in the kernel are contiguous rows,
    # plus a ones column (bias fold) and zero padding to an 8-wide lane block.
    x_tm = jnp.transpose(x, (1, 0, 2)).reshape(T * B, F)
    x2d = jnp.concatenate(
        [x_tm.astype(jnp.float32),
         jnp.ones((T * B, 1), jnp.float32),
         jnp.zeros((T * B, Fp - F - 1), jnp.float32)], axis=-1)   # (T*B, 8)

    vmem = pl.BlockSpec(memory_space=pltpu.MemorySpace.VMEM)
    smem = pl.BlockSpec(memory_space=pltpu.MemorySpace.SMEM)
    return pl.pallas_call(
        lstm_kernel,
        out_shape=jax.ShapeDtypeStruct((B, 1), jnp.float32),
        in_specs=[vmem, vmem, vmem, smem],
        out_specs=vmem,
    )(x2d, w_cat, w_lin, b_lin)
    # TODO(synk): for large B, add grid=(cdiv(B, TB),) with
    # dimension_semantics=("parallel",), TB a multiple of 128 (v5e) / 256
    # (v6e/v7x), bf16 inputs on v6e/v7x, and a lane-dense output layout.


def init_params(key, input_size, hidden_size):
    """PyTorch-like init (uniform(-1/sqrt(H), 1/sqrt(H))) + kernel packing."""
    F, H = input_size, hidden_size
    Fp = 8
    k = 1.0 / jnp.sqrt(jnp.float32(H))
    ks = jax.random.split(key, 6)
    # PyTorch shapes: weight_ih (4H, F), weight_hh (4H, H), biases (4H,), gate rows [i,f,g,o].
    w_ih_pt = jax.random.uniform(ks[0], (4 * H, F), jnp.float32, -k, k)
    w_hh_pt = jax.random.uniform(ks[1], (4 * H, H), jnp.float32, -k, k)
    b_ih = jax.random.uniform(ks[2], (4 * H,), jnp.float32, -k, k)
    b_hh = jax.random.uniform(ks[3], (4 * H,), jnp.float32, -k, k)
    w_lin = jax.random.uniform(ks[4], (1, H), jnp.float32, -k, k)
    b_lin = jax.random.uniform(ks[5], (1,), jnp.float32, -k, k)

    # Reorder gate blocks [i,f,g,o] -> lane blocks [i,f,o,2*g] (g pre-scaled by 2
    # for the tanh-via-sigmoid identity), transposed to right-multiply layout.
    def regate(w):                                   # w: (4H, X) -> (X, 4H)
        i_, f_, g_, o_ = jnp.split(w, 4, axis=0)
        return jnp.concatenate([i_, f_, o_, 2.0 * g_], axis=0).T

    w_ih_cat = regate(w_ih_pt)                       # (F, 4H)
    w_hh_cat = regate(w_hh_pt)                       # (H, 4H)
    b_cat = regate((b_ih + b_hh)[:, None])           # (1, 4H)

    # Rows [H, H+8): W_ih^T (F rows) | bias row (matches the ones column of x) | zeros.
    w_ihb = jnp.concatenate(
        [w_ih_cat, b_cat, jnp.zeros((Fp - F - 1, 4 * H), jnp.float32)], axis=0)  # (8, 4H)
    w_cat = jnp.concatenate([w_hh_cat, w_ihb], axis=0)                           # (H+8, 4H)

    packed = (w_cat, w_lin, b_lin.reshape(1, 1))
    raw = (w_ih_pt, w_hh_pt, b_ih, b_hh, w_lin, b_lin)
    return packed, raw


def ref_forward(x, raw):
    """Pure-JAX reference with PyTorch LSTM semantics (correctness check)."""
    w_ih, w_hh, b_ih, b_hh, w_lin, b_lin = raw
    B, T, F = x.shape
    H = w_hh.shape[1]

    def step(carry, x_t):
        h, c = carry
        g = x_t @ w_ih.T + h @ w_hh.T + b_ih + b_hh
        i = jax.nn.sigmoid(g[:, 0:H])
        f = jax.nn.sigmoid(g[:, H:2 * H])
        gg = jnp.tanh(g[:, 2 * H:3 * H])
        o = jax.nn.sigmoid(g[:, 3 * H:4 * H])
        c = f * c + i * gg
        h = o * jnp.tanh(c)
        return (h, c), None

    init = (jnp.zeros((B, H), jnp.float32), jnp.zeros((B, H), jnp.float32))
    (h, _), _ = jax.lax.scan(step, init, jnp.transpose(x, (1, 0, 2)))
    return h @ w_lin.T + b_lin


if __name__ == "__main__":
    B, T, F, H = 2, 8, 4, 32   # input_size=4 fixed by the module; hidden=32 -> 4H=128

    root = jax.random.PRNGKey(0)
    kx, kp = jax.random.split(root)
    x = jax.random.normal(kx, (B, T, F), jnp.float32)
    (w_cat, w_lin, b_lin_s), raw = init_params(kp, F, H)

    out = jax.block_until_ready(lstm_model_forward(x, w_cat, w_lin, b_lin_s))
    ref = ref_forward(x, raw)

    assert out.shape == (B, 1)
    assert jnp.allclose(out, ref, atol=1e-5, rtol=1e-5), (out, ref)

    print("KERNEL_OK")
</pallas_src>

<mosaic_0001>
module attributes {stable_mosaic.version = 11 : i64} {
  func.func @lstm_kernel(%arg0: memref<16x8xf32, #tpu.memory_space<vmem>>, %arg1: memref<40x128xf32, #tpu.memory_space<vmem>>, %arg2: memref<1x32xf32, #tpu.memory_space<vmem>>, %arg3: memref<1x1xf32, #tpu.memory_space<smem>>, %arg4: memref<2x1xf32, #tpu.memory_space<vmem>>) attributes {dimension_semantics = [], scalar_prefetch = 0 : i64, scratch_operands = 0 : i64, tpu.core_type = #tpu.core_type<tc>} {
    %c0 = arith.constant 0 : index
    %c0_0 = arith.constant 0 : index
    %0 = vector.load %arg1[%c0, %c0_0] : memref<40x128xf32, #tpu.memory_space<vmem>>, vector<32x128xf32>
    %c32 = arith.constant 32 : index
    %c0_1 = arith.constant 0 : index
    %1 = vector.load %arg1[%c32, %c0_1] : memref<40x128xf32, #tpu.memory_space<vmem>>, vector<8x128xf32>
    %c0_2 = arith.constant 0 : index
    %c0_3 = arith.constant 0 : index
    %2 = vector.load %arg0[%c0_2, %c0_3] : memref<16x8xf32, #tpu.memory_space<vmem>>, vector<16x8xf32>
    %cst = arith.constant dense<0.000000e+00> : vector<16x128xf32>
    %3 = tpu.matmul %2, %1, %cst {dimension_numbers = #tpu.dot_dimension_numbers<[1], [0], [0], [1], [0, 0, 1, 1], [], []>} : vector<16x8xf32>, vector<8x128xf32>, vector<16x128xf32> -> vector<16x128xf32>
    %4 = vector.extract_strided_slice %3 {offsets = [0, 0], sizes = [2, 128], strides = [1, 1]} : vector<16x128xf32> to vector<2x128xf32>
    %cst_4 = arith.constant 0.000000e+00 : f32
    %5 = vector.broadcast %cst_4 : f32 to vector<2x32xf32>
    %6 = arith.negf %4 : vector<2x128xf32>
    %7 = math.exp %6 : vector<2x128xf32>
    %cst_5 = arith.constant 1.000000e+00 : f32
    %8 = vector.broadcast %cst_5 : f32 to vector<2x128xf32>
    %9 = arith.addf %8, %7 : vector<2x128xf32>
    %10 = arith.divf %8, %9 : vector<2x128xf32>
    %11 = vector.extract_strided_slice %10 {offsets = [0, 0], sizes = [2, 32], strides = [1, 1]} : vector<2x128xf32> to vector<2x32xf32>
    %12 = vector.extract_strided_slice %10 {offsets = [0, 32], sizes = [2, 32], strides = [1, 1]} : vector<2x128xf32> to vector<2x32xf32>
    %13 = vector.extract_strided_slice %10 {offsets = [0, 64], sizes = [2, 32], strides = [1, 1]} : vector<2x128xf32> to vector<2x32xf32>
    %14 = vector.extract_strided_slice %10 {offsets = [0, 96], sizes = [2, 32], strides = [1, 1]} : vector<2x128xf32> to vector<2x32xf32>
    %cst_6 = arith.constant 2.000000e+00 : f32
    %15 = vector.broadcast %cst_6 : f32 to vector<2x32xf32>
    %16 = arith.mulf %15, %14 : vector<2x32xf32>
    %cst_7 = arith.constant 1.000000e+00 : f32
    %17 = vector.broadcast %cst_7 : f32 to vector<2x32xf32>
    %18 = arith.subf %16, %17 : vector<2x32xf32>
    %19 = arith.mulf %12, %5 : vector<2x32xf32>
    %20 = arith.mulf %11, %18 : vector<2x32xf32>
    %21 = arith.addf %19, %20 : vector<2x32xf32>
    %22 = math.tanh %21 : vector<2x32xf32>
    %23 = arith.mulf %13, %22 : vector<2x32xf32>
    %24 = vector.extract_strided_slice %3 {offsets = [2, 0], sizes = [2, 128], strides = [1, 1]} : vector<16x128xf32> to vector<2x128xf32>
    %cst_8 = arith.constant dense<0.000000e+00> : vector<2x128xf32>
    %25 = tpu.matmul %23, %0, %cst_8 {dimension_numbers = #tpu.dot_dimension_numbers<[1], [0], [0], [1], [0, 0, 1, 1], [], []>} : vector<2x32xf32>, vector<32x128xf32>, vector<2x128xf32> -> vector<2x128xf32>
    %26 = arith.addf %24, %25 : vector<2x128xf32>
    %27 = arith.negf %26 : vector<2x128xf32>
    %28 = math.exp %27 : vector<2x128xf32>
    %cst_9 = arith.constant 1.000000e+00 : f32
    %29 = vector.broadcast %cst_9 : f32 to vector<2x128xf32>
    %30 = arith.addf %29, %28 : vector<2x128xf32>
    %31 = arith.divf %29, %30 : vector<2x128xf32>
    %32 = vector.extract_strided_slice %31 {offsets = [0, 0], sizes = [2, 32], strides = [1, 1]} : vector<2x128xf32> to vector<2x32xf32>
    %33 = vector.extract_strided_slice %31 {offsets = [0, 32], sizes = [2, 32], strides = [1, 1]} : vector<2x128xf32> to vector<2x32xf32>
    %34 = vector.extract_strided_slice %31 {offsets = [0, 64], sizes = [2, 32], strides = [1, 1]} : vector<2x128xf32> to vector<2x32xf32>
    %35 = vector.extract_strided_slice %31 {offsets = [0, 96], sizes = [2, 32], strides = [1, 1]} : vector<2x128xf32> to vector<2x32xf32>
    %cst_10 = arith.constant 2.000000e+00 : f32
    %36 = vector.broadcast %cst_10 : f32 to vector<2x32xf32>
    %37 = arith.mulf %36, %35 : vector<2x32xf32>
    %cst_11 = arith.constant 1.000000e+00 : f32
    %38 = vector.broadcast %cst_11 : f32 to vector<2x32xf32>
    %39 = arith.subf %37, %38 : vector<2x32xf32>
    %40 = arith.mulf %33, %21 : vector<2x32xf32>
    %41 = arith.mulf %32, %39 : vector<2x32xf32>
    %42 = arith.addf %40, %41 : vector<2x32xf32>
    %43 = math.tanh %42 : vector<2x32xf32>
    %44 = arith.mulf %34, %43 : vector<2x32xf32>
    %45 = vector.extract_strided_slice %3 {offsets = [4, 0], sizes = [2, 128], strides = [1, 1]} : vector<16x128xf32> to vector<2x128xf32>
    %cst_12 = arith.constant dense<0.000000e+00> : vector<2x128xf32>
    %46 = tpu.matmul %44, %0, %cst_12 {dimension_numbers = #tpu.dot_dimension_numbers<[1], [0], [0], [1], [0, 0, 1, 1], [], []>} : vector<2x32xf32>, vector<32x128xf32>, vector<2x128xf32> -> vector<2x128xf32>
    %47 = arith.addf %45, %46 : vector<2x128xf32>
    %48 = arith.negf %47 : vector<2x128xf32>
    %49 = math.exp %48 : vector<2x128xf32>
    %cst_13 = arith.constant 1.000000e+00 : f32
    %50 = vector.broadcast %cst_13 : f32 to vector<2x128xf32>
    %51 = arith.addf %50, %49 : vector<2x128xf32>
    %52 = arith.divf %50, %51 : vector<2x128xf32>
    %53 = vector.extract_strided_slice %52 {offsets = [0, 0], sizes = [2, 32], strides = [1, 1]} : vector<2x128xf32> to vector<2x32xf32>
    %54 = vector.extract_strided_slice %52 {offsets = [0, 32], sizes = [2, 32], strides = [1, 1]} : vector<2x128xf32> to vector<2x32xf32>
    %55 = vector.extract_strided_slice %52 {offsets = [0, 64], sizes = [2, 32], strides = [1, 1]} : vector<2x128xf32> to vector<2x32xf32>
    %56 = vector.extract_strided_slice %52 {offsets = [0, 96], sizes = [2, 32], strides = [1, 1]} : vector<2x128xf32> to vector<2x32xf32>
    %cst_14 = arith.constant 2.000000e+00 : f32
    %57 = vector.broadcast %cst_14 : f32 to vector<2x32xf32>
    %58 = arith.mulf %57, %56 : vector<2x32xf32>
    %cst_15 = arith.constant 1.000000e+00 : f32
    %59 = vector.broadcast %cst_15 : f32 to vector<2x32xf32>
    %60 = arith.subf %58, %59 : vector<2x32xf32>
    %61 = arith.mulf %54, %42 : vector<2x32xf32>
    %62 = arith.mulf %53, %60 : vector<2x32xf32>
    %63 = arith.addf %61, %62 : vector<2x32xf32>
    %64 = math.tanh %63 : vector<2x32xf32>
    %65 = arith.mulf %55, %64 : vector<2x32xf32>
    %66 = vector.extract_strided_slice %3 {offsets = [6, 0], sizes = [2, 128], strides = [1, 1]} : vector<16x128xf32> to vector<2x128xf32>
    %cst_16 = arith.constant dense<0.000000e+00> : vector<2x128xf32>
    %67 = tpu.matmul %65, %0, %cst_16 {dimension_numbers = #tpu.dot_dimension_numbers<[1], [0], [0], [1], [0, 0, 1, 1], [], []>} : vector<2x32xf32>, vector<32x128xf32>, vector<2x128xf32> -> vector<2x128xf32>
    %68 = arith.addf %66, %67 : vector<2x128xf32>
    %69 = arith.negf %68 : vector<2x128xf32>
    %70 = math.exp %69 : vector<2x128xf32>
    %cst_17 = arith.constant 1.000000e+00 : f32
    %71 = vector.broadcast %cst_17 : f32 to vector<2x128xf32>
    %72 = arith.addf %71, %70 : vector<2x128xf32>
    %73 = arith.divf %71, %72 : vector<2x128xf32>
    %74 = vector.extract_strided_slice %73 {offsets = [0, 0], sizes = [2, 32], strides = [1, 1]} : vector<2x128xf32> to vector<2x32xf32>
    %75 = vector.extract_strided_slice %73 {offsets = [0, 32], sizes = [2, 32], strides = [1, 1]} : vector<2x128xf32> to vector<2x32xf32>
    %76 = vector.extract_strided_slice %73 {offsets = [0, 64], sizes = [2, 32], strides = [1, 1]} : vector<2x128xf32> to vector<2x32xf32>
    %77 = vector.extract_strided_slice %73 {offsets = [0, 96], sizes = [2, 32], strides = [1, 1]} : vector<2x128xf32> to vector<2x32xf32>
    %cst_18 = arith.constant 2.000000e+00 : f32
    %78 = vector.broadcast %cst_18 : f32 to vector<2x32xf32>
    %79 = arith.mulf %78, %77 : vector<2x32xf32>
    %cst_19 = arith.constant 1.000000e+00 : f32
    %80 = vector.broadcast %cst_19 : f32 to vector<2x32xf32>
    %81 = arith.subf %79, %80 : vector<2x32xf32>
    %82 = arith.mulf %75, %63 : vector<2x32xf32>
    %83 = arith.mulf %74, %81 : vector<2x32xf32>
    %84 = arith.addf %82, %83 : vector<2x32xf32>
    %85 = math.tanh %84 : vector<2x32xf32>
    %86 = arith.mulf %76, %85 : vector<2x32xf32>
    %87 = vector.extract_strided_slice %3 {offsets = [8, 0], sizes = [2, 128], strides = [1, 1]} : vector<16x128xf32> to vector<2x128xf32>
    %cst_20 = arith.constant dense<0.000000e+00> : vector<2x128xf32>
    %88 = tpu.matmul %86, %0, %cst_20 {dimension_numbers = #tpu.dot_dimension_numbers<[1], [0], [0], [1], [0, 0, 1, 1], [], []>} : vector<2x32xf32>, vector<32x128xf32>, vector<2x128xf32> -> vector<2x128xf32>
    %89 = arith.addf %87, %88 : vector<2x128xf32>
    %90 = arith.negf %89 : vector<2x128xf32>
    %91 = math.exp %90 : vector<2x128xf32>
    %cst_21 = arith.constant 1.000000e+00 : f32
    %92 = vector.broadcast %cst_21 : f32 to vector<2x128xf32>
    %93 = arith.addf %92, %91 : vector<2x128xf32>
    %94 = arith.divf %92, %93 : vector<2x128xf32>
    %95 = vector.extract_strided_slice %94 {offsets = [0, 0], sizes = [2, 32], strides = [1, 1]} : vector<2x128xf32> to vector<2x32xf32>
    %96 = vector.extract_strided_slice %94 {offsets = [0, 32], sizes = [2, 32], strides = [1, 1]} : vector<2x128xf32> to vector<2x32xf32>
    %97 = vector.extract_strided_slice %94 {offsets = [0, 64], sizes = [2, 32], strides = [1, 1]} : vector<2x128xf32> to vector<2x32xf32>
    %98 = vector.extract_strided_slice %94 {offsets = [0, 96], sizes = [2, 32], strides = [1, 1]} : vector<2x128xf32> to vector<2x32xf32>
    %cst_22 = arith.constant 2.000000e+00 : f32
    %99 = vector.broadcast %cst_22 : f32 to vector<2x32xf32>
    %100 = arith.mulf %99, %98 : vector<2x32xf32>
    %cst_23 = arith.constant 1.000000e+00 : f32
    %101 = vector.broadcast %cst_23 : f32 to vector<2x32xf32>
    %102 = arith.subf %100, %101 : vector<2x32xf32>
    %103 = arith.mulf %96, %84 : vector<2x32xf32>
    %104 = arith.mulf %95, %102 : vector<2x32xf32>
    %105 = arith.addf %103, %104 : vector<2x32xf32>
    %106 = math.tanh %105 : vector<2x32xf32>
    %107 = arith.mulf %97, %106 : vector<2x32xf32>
    %108 = vector.extract_strided_slice %3 {offsets = [10, 0], sizes = [2, 128], strides = [1, 1]} : vector<16x128xf32> to vector<2x128xf32>
    %cst_24 = arith.constant dense<0.000000e+00> : vector<2x128xf32>
    %109 = tpu.matmul %107, %0, %cst_24 {dimension_numbers = #tpu.dot_dimension_numbers<[1], [0], [0], [1], [0, 0, 1, 1], [], []>} : vector<2x32xf32>, vector<32x128xf32>, vector<2x128xf32> -> vector<2x128xf32>
    %110 = arith.addf %108, %109 : vector<2x128xf32>
    %111 = arith.negf %110 : vector<2x128xf32>
    %112 = math.exp %111 : vector<2x128xf32>
    %cst_25 = arith.constant 1.000000e+00 : f32
    %113 = vector.broadcast %cst_25 : f32 to vector<2x128xf32>
    %114 = arith.addf %113, %112 : vector<2x128xf32>
    %115 = arith.divf %113, %114 : vector<2x128xf32>
    %116 = vector.extract_strided_slice %115 {offsets = [0, 0], sizes = [2, 32], strides = [1, 1]} : vector<2x128xf32> to vector<2x32xf32>
    %117 = vector.extract_strided_slice %115 {offsets = [0, 32], sizes = [2, 32], strides = [1, 1]} : vector<2x128xf32> to vector<2x32xf32>
    %118 = vector.extract_strided_slice %115 {offsets = [0, 64], sizes = [2, 32], strides = [1, 1]} : vector<2x128xf32> to vector<2x32xf32>
    %119 = vector.extract_strided_slice %115 {offsets = [0, 96], sizes = [2, 32], strides = [1, 1]} : vector<2x128xf32> to vector<2x32xf32>
    %cst_26 = arith.constant 2.000000e+00 : f32
    %120 = vector.broadcast %cst_26 : f32 to vector<2x32xf32>
    %121 = arith.mulf %120, %119 : vector<2x32xf32>
    %cst_27 = arith.constant 1.000000e+00 : f32
    %122 = vector.broadcast %cst_27 : f32 to vector<2x32xf32>
    %123 = arith.subf %121, %122 : vector<2x32xf32>
    %124 = arith.mulf %117, %105 : vector<2x32xf32>
    %125 = arith.mulf %116, %123 : vector<2x32xf32>
    %126 = arith.addf %124, %125 : vector<2x32xf32>
    %127 = math.tanh %126 : vector<2x32xf32>
    %128 = arith.mulf %118, %127 : vector<2x32xf32>
    %129 = vector.extract_strided_slice %3 {offsets = [12, 0], sizes = [2, 128], strides = [1, 1]} : vector<16x128xf32> to vector<2x128xf32>
    %cst_28 = arith.constant dense<0.000000e+00> : vector<2x128xf32>
    %130 = tpu.matmul %128, %0, %cst_28 {dimension_numbers = #tpu.dot_dimension_numbers<[1], [0], [0], [1], [0, 0, 1, 1], [], []>} : vector<2x32xf32>, vector<32x128xf32>, vector<2x128xf32> -> vector<2x128xf32>
    %131 = arith.addf %129, %130 : vector<2x128xf32>
    %132 = arith.negf %131 : vector<2x128xf32>
    %133 = math.exp %132 : vector<2x128xf32>
    %cst_29 = arith.constant 1.000000e+00 : f32
    %134 = vector.broadcast %cst_29 : f32 to vector<2x128xf32>
    %135 = arith.addf %134, %133 : vector<2x128xf32>
    %136 = arith.divf %134, %135 : vector<2x128xf32>
    %137 = vector.extract_strided_slice %136 {offsets = [0, 0], sizes = [2, 32], strides = [1, 1]} : vector<2x128xf32> to vector<2x32xf32>
    %138 = vector.extract_strided_slice %136 {offsets = [0, 32], sizes = [2, 32], strides = [1, 1]} : vector<2x128xf32> to vector<2x32xf32>
    %139 = vector.extract_strided_slice %136 {offsets = [0, 64], sizes = [2, 32], strides = [1, 1]} : vector<2x128xf32> to vector<2x32xf32>
    %140 = vector.extract_strided_slice %136 {offsets = [0, 96], sizes = [2, 32], strides = [1, 1]} : vector<2x128xf32> to vector<2x32xf32>
    %cst_30 = arith.constant 2.000000e+00 : f32
    %141 = vector.broadcast %cst_30 : f32 to vector<2x32xf32>
    %142 = arith.mulf %141, %140 : vector<2x32xf32>
    %cst_31 = arith.constant 1.000000e+00 : f32
    %143 = vector.broadcast %cst_31 : f32 to vector<2x32xf32>
    %144 = arith.subf %142, %143 : vector<2x32xf32>
    %145 = arith.mulf %138, %126 : vector<2x32xf32>
    %146 = arith.mulf %137, %144 : vector<2x32xf32>
    %147 = arith.addf %145, %146 : vector<2x32xf32>
    %148 = math.tanh %147 : vector<2x32xf32>
    %149 = arith.mulf %139, %148 : vector<2x32xf32>
    %150 = vector.extract_strided_slice %3 {offsets = [14, 0], sizes = [2, 128], strides = [1, 1]} : vector<16x128xf32> to vector<2x128xf32>
    %cst_32 = arith.constant dense<0.000000e+00> : vector<2x128xf32>
    %151 = tpu.matmul %149, %0, %cst_32 {dimension_numbers = #tpu.dot_dimension_numbers<[1], [0], [0], [1], [0, 0, 1, 1], [], []>} : vector<2x32xf32>, vector<32x128xf32>, vector<2x128xf32> -> vector<2x128xf32>
    %152 = arith.addf %150, %151 : vector<2x128xf32>
    %153 = arith.negf %152 : vector<2x128xf32>
    %154 = math.exp %153 : vector<2x128xf32>
    %cst_33 = arith.constant 1.000000e+00 : f32
    %155 = vector.broadcast %cst_33 : f32 to vector<2x128xf32>
    %156 = arith.addf %155, %154 : vector<2x128xf32>
    %157 = arith.divf %155, %156 : vector<2x128xf32>
    %158 = vector.extract_strided_slice %157 {offsets = [0, 0], sizes = [2, 32], strides = [1, 1]} : vector<2x128xf32> to vector<2x32xf32>
    %159 = vector.extract_strided_slice %157 {offsets = [0, 32], sizes = [2, 32], strides = [1, 1]} : vector<2x128xf32> to vector<2x32xf32>
    %160 = vector.extract_strided_slice %157 {offsets = [0, 64], sizes = [2, 32], strides = [1, 1]} : vector<2x128xf32> to vector<2x32xf32>
    %161 = vector.extract_strided_slice %157 {offsets = [0, 96], sizes = [2, 32], strides = [1, 1]} : vector<2x128xf32> to vector<2x32xf32>
    %cst_34 = arith.constant 2.000000e+00 : f32
    %162 = vector.broadcast %cst_34 : f32 to vector<2x32xf32>
    %163 = arith.mulf %162, %161 : vector<2x32xf32>
    %cst_35 = arith.constant 1.000000e+00 : f32
    %164 = vector.broadcast %cst_35 : f32 to vector<2x32xf32>
    %165 = arith.subf %163, %164 : vector<2x32xf32>
    %166 = arith.mulf %159, %147 : vector<2x32xf32>
    %167 = arith.mulf %158, %165 : vector<2x32xf32>
    %168 = arith.addf %166, %167 : vector<2x32xf32>
    %169 = math.tanh %168 : vector<2x32xf32>
    %170 = arith.mulf %160, %169 : vector<2x32xf32>
    %c0_36 = arith.constant 0 : index
    %c0_37 = arith.constant 0 : index
    %171 = vector.load %arg2[%c0_36, %c0_37] : memref<1x32xf32, #tpu.memory_space<vmem>>, vector<1x32xf32>
    %172 = vector.broadcast %171 : vector<1x32xf32> to vector<2x32xf32>
    %173 = arith.mulf %170, %172 : vector<2x32xf32>
    %cst_38 = arith.constant dense<0.000000e+00> : vector<2xf32>
    %174 = vector.multi_reduction <add>, %173, %cst_38 [1] : vector<2x32xf32> to vector<2xf32>
    %175 = vector.shape_cast %174 : vector<2xf32> to vector<2x1xf32>
    %c0_39 = arith.constant 0 : index
    %c0_40 = arith.constant 0 : index
    %176 = memref.load %arg3[%c0_39, %c0_40] : memref<1x1xf32, #tpu.memory_space<smem>>
    %177 = vector.broadcast %176 : f32 to vector<2x1xf32>
    %178 = arith.addf %175, %177 : vector<2x1xf32>
    %c0_41 = arith.constant 0 : index
    %c0_42 = arith.constant 0 : index
    %179 = vector.load %arg4[%c0_41, %c0_42] : memref<2x1xf32, #tpu.memory_space<vmem>>, vector<2x1xf32>
    tpu.vector_store %arg4[%c0_41, %c0_42], %178 {strides = array<i32>} : memref<2x1xf32, #tpu.memory_space<vmem>>, vector<2x1xf32>,
    return
  }
}

</mosaic_0001>

<llo_original>
// kernel: lstm_model_forward.1
$region0: #{lstm_model_forward.1}
  #allocation0 [shape = 'u32[]', space=smem, size = 0x4, offset = 0x4, fixed_abs, tag = 'smem constant byte address 0x4 - core index']
  #allocation1 [shape = 'u32[144,128]{1,0:T(1,128)}', space=vmem, size = 0x12000, scoped, tag = 'internal scratch']
  #allocation2 [shape = 'f32[1,1]{1,0:T(1,128)S(6)}', space=smem, size = 0x200, scoped, tag = 'scoped memory for lstm_model_forward.1']
  %s0 = inlined_call_operand.vmem [shape: f32[16,8], index: 0, kind: input, shape index: {}]
  %s1 = inlined_call_operand.vmem [shape: f32[40,128], index: 1, kind: input, shape index: {}]
  %s2 = inlined_call_operand.vmem [shape: f32[1,32], index: 2, kind: input, shape index: {}]
  %s3 = inlined_call_operand.<no memory space> [shape: f32[1,1], index: 3, kind: input, shape index: {}]
  %s4 = inlined_call_operand.vmem [shape: f32[2,1], index: 4, kind: output, shape index: {}]
  %s5 = sld [smem:[#allocation0]]
  $region26: #{lstm_model_forward.1} parent=0
    _
  %s7 = ssub.s32 1, %s5
  %s8 = scalar_select 0, %s7, %s5
  %9 = sst [smem:[#allocation2]] %s3
  // Predicated region
  $region2: #{lstm_model_forward.1} parent=0 // pred_check
    _
  $region3: #{lstm_model_forward.1} parent=0 // pred_check_branch
    %11 = sbr.rel (0) target = $region5
  $region4: #{lstm_model_forward.1} parent=0 // pred_region
    _
  $region5: #{lstm_model_forward.1} parent=0 // pred_fallthru
    _
  // Predicated region
  $region6: #{lstm_model_forward.1} parent=0 // pred_check
    _
  $region7: #{lstm_model_forward.1} parent=0 // pred_check_branch
    %13 = sbr.rel (0) target = $region9
  $region8: #{lstm_model_forward.1} parent=0 // pred_region
    _
  $region9: #{lstm_model_forward.1} parent=0 // pred_fallthru
    _
  // Predicated region
  $region10: #{lstm_model_forward.1} parent=0 // pred_check
    _
  $region11: #{lstm_model_forward.1} parent=0 // pred_check_branch
    %15 = sbr.rel (0) target = $region13
  $region12: #{lstm_model_forward.1} parent=0 // pred_region
    _
  $region13: #{lstm_model_forward.1} parent=0 // pred_fallthru
    _
  // Predicated region
  $region14: #{lstm_model_forward.1} parent=0 // pred_check
    _
  $region15: #{lstm_model_forward.1} parent=0 // pred_check_branch
    %17 = sbr.rel (0) target = $region17
  $region16: #{lstm_model_forward.1} parent=0 // pred_region
    _
  $region17: #{lstm_model_forward.1} parent=0 // pred_fallthru
    _
  %v18 = vld [vmem:[%s1] sm:$0xff]
  %v19 = vld [vmem:[%s1 + $0x8] sm:$0xff]
  %v20 = vld [vmem:[%s1 + $0x10] sm:$0xff]
  %v21 = vld [vmem:[%s1 + $0x18] sm:$0xff]
  %v22 = vld [vmem:[%s1 + $0x20] sm:$0xff]
  %v23 = vld [vmem:[%s0] sm:$0xff]
  %v24 = vld [vmem:[%s0 + $0x8] sm:$0xff]
  %vm25 = vcmask 64512
  %v27 = vsel %vm25, %v23, 0
  %v30 = vsel %vm25, %v24, 0
  %32 = vmatprep.subr.mxu0 0.0
  %33 = vmatpush1.msra.mxu0 %v22
  %34 = vmatprep.subr.mxu0 0.0
  %35 = vmatpush1.msra.mxu0 0.0
  %36 = vmatprep.subr.mxu0 0.0
  %37 = vmatpush1.msra.mxu0 0.0
  %38 = vmatprep.subr.mxu0 0.0
  %39 = vmatpush1.msra.mxu0 0.0
  %40 = vmatprep.subr.mxu0 0.0
  %41 = vmatpush1.msra.mxu0 0.0
  %42 = vmatprep.subr.mxu0 0.0
  %43 = vmatpush1.msra.mxu0 0.0
  %44 = vmatprep.subr.mxu0 0.0
  %45 = vmatpush1.msra.mxu0 0.0
  %46 = vmatprep.subr.mxu0 0.0
  %47 = vmatpush1.msra.mxu0 0.0
  %48 = vmatprep.subr.mxu0 0.0
  %49 = vmatpush1.msra.mxu0 0.0
  %50 = vmatprep.subr.mxu0 0.0
  %51 = vmatpush1.msra.mxu0 0.0
  %52 = vmatprep.subr.mxu0 0.0
  %53 = vmatpush1.msra.mxu0 0.0
  %54 = vmatprep.subr.mxu0 0.0
  %55 = vmatpush1.msra.mxu0 0.0
  %56 = vmatprep.subr.mxu0 0.0
  %57 = vmatpush1.msra.mxu0 0.0
  %58 = vmatprep.subr.mxu0 0.0
  %59 = vmatpush1.msra.mxu0 0.0
  %60 = vmatprep.subr.mxu0 0.0
  %61 = vmatpush1.msra.mxu0 0.0
  %62 = vmatprep.subr.mxu0 0.0
  %63 = vmatpush1.msra.mxu0 0.0
  %64 = vmatprep.subr.mxu0 0.0
  %65 = vmatpush1.msra.mxu0 0.0
  %66 = vmatprep.subr.mxu0 0.0
  %67 = vmatpush1.msra.mxu0 0.0
  %68 = vmatprep.subr.mxu0 0.0
  %69 = vmatpush1.msra.mxu0 0.0
  %70 = vmatprep.subr.mxu0 0.0
  %71 = vmatpush1.msra.mxu0 0.0
  %72 = vmatprep.subr.mxu0 0.0
  %73 = vmatpush1.msra.mxu0 0.0
  %74 = vmatprep.subr.mxu0 0.0
  %75 = vmatpush1.msra.mxu0 0.0
  %76 = vmatprep.subr.mxu0 0.0
  %77 = vmatpush1.msra.mxu0 0.0
  %78 = vmatprep.subr.mxu0 0.0
  %79 = vmatpush1.msra.mxu0 0.0
  %80 = vmatprep.subr.mxu0 0.0
  %81 = vmatpush1.msra.mxu0 0.0
  %82 = vmatprep.subr.mxu0 0.0
  %83 = vmatpush1.msra.mxu0 0.0
  %84 = vmatprep.subr.mxu0 0.0
  %85 = vmatpush1.msra.mxu0 0.0
  %86 = vmatprep.subr.mxu0 0.0
  %87 = vmatpush1.msra.mxu0 0.0
  %88 = vmatprep.subr.mxu0 0.0
  %89 = vmatpush1.msra.mxu0 0.0
  %90 = vmatprep.subr.mxu0 0.0
  %91 = vmatpush1.msra.mxu0 0.0
  %92 = vmatprep.subr.mxu0 0.0
  %93 = vmatpush1.msra.mxu0 0.0
  %94 = vmatprep.subr.mxu0 0.0
  %95 = vmatpush1.msra.mxu0 0.0
  %96 = vmatprep.mubr.f32.mxu0 0.0
  %97 = vmatmul.mubr.f32.gmra.mrb[0].mxu0 %v27
  %v98 = vpop.f32.mrb[0].mxu0
  %v99 = vadd.f32 0.0, %v98
  %v100 = vpop.f32.mrb[0].mxu0
  %101 = vmatprep.mubr.f32.mxu0 0.0
  %102 = vmatmul.mubr.f32.gmra.mrb[0].mxu0 %v30
  %v103 = vpop.f32.mrb[0].mxu0
  %v104 = vadd.f32 0.0, %v103
  %v105 = vpop.f32.mrb[0].mxu0
  %106 = vdwg.mxu0
  %v107 = vxor.u32 %v99, 2147483648
  %v108 = vmul.f32 %v107, 1.442695
  %v109 = vpow.pop %v108
  %v110 = vadd.f32 %v109, 1.0
  %v111 = vrcp.pop %v110
  %v112 = vmul.f32 1.0, %v111
  %v113 = vmul.f32 %v112, 2.0
  %v114 = vsub.f32 %v113, 1.0
  %v115 = vmul.f32 %v112, 0.0
  %117 = vrot.lane.b32.xlu0 %v114, 32
  %v118 = vpop.permute.xlu0 %117
  %v120 = vmul.f32 %v112, %v118
  %122 = vrot.lane.b32.xlu0 %v120, 32
  %v123 = vpop.permute.xlu0 %122
  %v125 = vadd.f32 %v115, %v123
  %v126 = vtanh.pop %v125
  %128 = vrot.lane.b32.xlu0 %v126, 32
  %v129 = vpop.permute.xlu0 %128
  %v131 = vmul.f32 %v112, %v129
  %133 = vrot.lane.b32.xlu0 %v131, 64
  %v134 = vpop.permute.xlu0 %133
  %vm135 = vcmask 261120
  %v136 = vsel %vm135, %v134, 0
  %138 = vmatprep.subr.mxu0 0.0
  %139 = vmatpush1.msra.mxu0 %v18
  %140 = vmatprep.subr.mxu0 0.0
  %141 = vmatpush1.msra.mxu0 %v19
  %142 = vmatprep.subr.mxu0 0.0
  %143 = vmatpush1.msra.mxu0 %v20
  %144 = vmatprep.subr.mxu0 0.0
  %145 = vmatpush1.msra.mxu0 %v21
  %146 = vmatprep.subr.mxu0 0.0
  %147 = vmatpush1.msra.mxu0 0.0
  %148 = vmatprep.subr.mxu0 0.0
  %149 = vmatpush1.msra.mxu0 0.0
  %150 = vmatprep.subr.mxu0 0.0
  %151 = vmatpush1.msra.mxu0 0.0
  %152 = vmatprep.subr.mxu0 0.0
  %153 = vmatpush1.msra.mxu0 0.0
  %154 = vmatprep.subr.mxu0 0.0
  %155 = vmatpush1.msra.mxu0 0.0
  %156 = vmatprep.subr.mxu0 0.0
  %157 = vmatpush1.msra.mxu0 0.0
  %158 = vmatprep.subr.mxu0 0.0
  %159 = vmatpush1.msra.mxu0 0.0
  %160 = vmatprep.subr.mxu0 0.0
  %161 = vmatpush1.msra.mxu0 0.0
  %162 = vmatprep.subr.mxu0 0.0
  %163 = vmatpush1.msra.mxu0 0.0
  %164 = vmatprep.subr.mxu0 0.0
  %165 = vmatpush1.msra.mxu0 0.0
  %166 = vmatprep.subr.mxu0 0.0
  %167 = vmatpush1.msra.mxu0 0.0
  %168 = vmatprep.subr.mxu0 0.0
  %169 = vmatpush1.msra.mxu0 0.0
  %170 = vmatprep.subr.mxu0 0.0
  %171 = vmatpush1.msra.mxu0 0.0
  %172 = vmatprep.subr.mxu0 0.0
  %173 = vmatpush1.msra.mxu0 0.0
  %174 = vmatprep.subr.mxu0 0.0
  %175 = vmatpush1.msra.mxu0 0.0
  %176 = vmatprep.subr.mxu0 0.0
  %177 = vmatpush1.msra.mxu0 0.0
  %178 = vmatprep.subr.mxu0 0.0
  %179 = vmatpush1.msra.mxu0 0.0
  %180 = vmatprep.subr.mxu0 0.0
  %181 = vmatpush1.msra.mxu0 0.0
  %182 = vmatprep.subr.mxu0 0.0
  %183 = vmatpush1.msra.mxu0 0.0
  %184 = vmatprep.subr.mxu0 0.0
  %185 = vmatpush1.msra.mxu0 0.0
  %186 = vmatprep.subr.mxu0 0.0
  %187 = vmatpush1.msra.mxu0 0.0
  %188 = vmatprep.subr.mxu0 0.0
  %189 = vmatpush1.msra.mxu0 0.0
  %190 = vmatprep.subr.mxu0 0.0
  %191 = vmatpush1.msra.mxu0 0.0
  %192 = vmatprep.subr.mxu0 0.0
  %193 = vmatpush1.msra.mxu0 0.0
  %194 = vmatprep.subr.mxu0 0.0
  %195 = vmatpush1.msra.mxu0 0.0
  %196 = vmatprep.subr.mxu0 0.0
  %197 = vmatpush1.msra.mxu0 0.0
  %198 = vmatprep.subr.mxu0 0.0
  %199 = vmatpush1.msra.mxu0 0.0
  %200 = vmatprep.subr.mxu0 0.0
  %201 = vmatpush1.msra.mxu0 0.0
  %202 = vmatprep.mubr.f32.mxu0 0.0
  %203 = vmatmul.mubr.f32.gmra.mrb[0].mxu0 %v136
  %v204 = vpop.f32.mrb[0].mxu0
  %v205 = vadd.f32 0.0, %v204
  %v206 = vpop.f32.mrb[0].mxu0
  %207 = vdwg.mxu0
  %v209 = vrot.slane %v205, 6
  %v211 = vadd.f32 %v99, %v209
  %v212 = vxor.u32 %v211, 2147483648
  %v213 = vmul.f32 %v212, 1.442695
  %v214 = vpow.pop %v213
  %v215 = vadd.f32 %v214, 1.0
  %v216 = vrcp.pop %v215
  %v217 = vmul.f32 1.0, %v216
  %v218 = vmul.f32 %v217, 2.0
  %v219 = vsub.f32 %v218, 1.0
  %v221 = vrot.slane %v125, 6
  %v223 = vmul.f32 %v217, %v221
  %225 = vrot.lane.b32.xlu0 %v219, 32
  %v226 = vpop.permute.xlu0 %225
  %v228 = vmul.f32 %v217, %v226
  %230 = vrot.lane.b32.xlu0 %v228, 32
  %v231 = vpop.permute.xlu0 %230
  %v233 = vadd.f32 %v223, %v231
  %v234 = vtanh.pop %v233
  %236 = vrot.lane.b32.xlu0 %v234, 32
  %v237 = vpop.permute.xlu0 %236
  %v239 = vmul.f32 %v217, %v237
  %v241 = vrot.slane %v239, 2
  %242 = vrot.lane.b32.xlu0 %v241, 64
  %v243 = vpop.permute.xlu0 %242
  %v244 = vsel %vm135, %v243, 0
  %246 = vmatprep.subr.mxu0 0.0
  %247 = vmatpush1.msra.mxu0 %v18
  %248 = vmatprep.subr.mxu0 0.0
  %249 = vmatpush1.msra.mxu0 %v19
  %250 = vmatprep.subr.mxu0 0.0
  %251 = vmatpush1.msra.mxu0 %v20
  %252 = vmatprep.subr.mxu0 0.0
  %253 = vmatpush1.msra.mxu0 %v21
  %254 = vmatprep.subr.mxu0 0.0
  %255 = vmatpush1.msra.mxu0 0.0
  %256 = vmatprep.subr.mxu0 0.0
  %257 = vmatpush1.msra.mxu0 0.0
  %258 = vmatprep.subr.mxu0 0.0
  %259 = vmatpush1.msra.mxu0 0.0
  %260 = vmatprep.subr.mxu0 0.0
  %261 = vmatpush1.msra.mxu0 0.0
  %262 = vmatprep.subr.mxu0 0.0
  %263 = vmatpush1.msra.mxu0 0.0
  %264 = vmatprep.subr.mxu0 0.0
  %265 = vmatpush1.msra.mxu0 0.0
  %266 = vmatprep.subr.mxu0 0.0
  %267 = vmatpush1.msra.mxu0 0.0
  %268 = vmatprep.subr.mxu0 0.0
  %269 = vmatpush1.msra.mxu0 0.0
  %270 = vmatprep.subr.mxu0 0.0
  %271 = vmatpush1.msra.mxu0 0.0
  %272 = vmatprep.subr.mxu0 0.0
  %273 = vmatpush1.msra.mxu0 0.0
  %274 = vmatprep.subr.mxu0 0.0
  %275 = vmatpush1.msra.mxu0 0.0
  %276 = vmatprep.subr.mxu0 0.0
  %277 = vmatpush1.msra.mxu0 0.0
  %278 = vmatprep.subr.mxu0 0.0
  %279 = vmatpush1.msra.mxu0 0.0
  %280 = vmatprep.subr.mxu0 0.0
  %281 = vmatpush1.msra.mxu0 0.0
  %282 = vmatprep.subr.mxu0 0.0
  %283 = vmatpush1.msra.mxu0 0.0
  %284 = vmatprep.subr.mxu0 0.0
  %285 = vmatpush1.msra.mxu0 0.0
  %286 = vmatprep.subr.mxu0 0.0
  %287 = vmatpush1.msra.mxu0 0.0
  %288 = vmatprep.subr.mxu0 0.0
  %289 = vmatpush1.msra.mxu0 0.0
  %290 = vmatprep.subr.mxu0 0.0
  %291 = vmatpush1.msra.mxu0 0.0
  %292 = vmatprep.subr.mxu0 0.0
  %293 = vmatpush1.msra.mxu0 0.0
  %294 = vmatprep.subr.mxu0 0.0
  %295 = vmatpush1.msra.mxu0 0.0
  %296 = vmatprep.subr.mxu0 0.0
  %297 = vmatpush1.msra.mxu0 0.0
  %298 = vmatprep.subr.mxu0 0.0
  %299 = vmatpush1.msra.mxu0 0.0
  %300 = vmatprep.subr.mxu0 0.0
  %301 = vmatpush1.msra.mxu0 0.0
  %302 = vmatprep.subr.mxu0 0.0
  %303 = vmatpush1.msra.mxu0 0.0
  %304 = vmatprep.subr.mxu0 0.0
  %305 = vmatpush1.msra.mxu0 0.0
  %306 = vmatprep.subr.mxu0 0.0
  %307 = vmatpush1.msra.mxu0 0.0
  %308 = vmatprep.subr.mxu0 0.0
  %309 = vmatpush1.msra.mxu0 0.0
  %310 = vmatprep.mubr.f32.mxu0 0.0
  %311 = vmatmul.mubr.f32.gmra.mrb[0].mxu0 %v244
  %v312 = vpop.f32.mrb[0].mxu0
  %v313 = vadd.f32 0.0, %v312
  %v314 = vpop.f32.mrb[0].mxu0
  %315 = vdwg.mxu0
  %v317 = vrot.slane %v313, 4
  %v319 = vadd.f32 %v99, %v317
  %v320 = vxor.u32 %v319, 2147483648
  %v321 = vmul.f32 %v320, 1.442695
  %v322 = vpow.pop %v321
  %v323 = vadd.f32 %v322, 1.0
  %v324 = vrcp.pop %v323
  %v325 = vmul.f32 1.0, %v324
  %v326 = vmul.f32 %v325, 2.0
  %v327 = vsub.f32 %v326, 1.0
  %v329 = vrot.slane %v233, 6
  %v331 = vmul.f32 %v325, %v329
  %333 = vrot.lane.b32.xlu0 %v327, 32
  %v334 = vpop.permute.xlu0 %333
  %v336 = vmul.f32 %v325, %v334
  %338 = vrot.lane.b32.xlu0 %v336, 32
  %v339 = vpop.permute.xlu0 %338
  %v341 = vadd.f32 %v331, %v339
  %v342 = vtanh.pop %v341
  %344 = vrot.lane.b32.xlu0 %v342, 32
  %v345 = vpop.permute.xlu0 %344
  %v347 = vmul.f32 %v325, %v345
  %v349 = vrot.slane %v347, 4
  %350 = vrot.lane.b32.xlu0 %v349, 64
  %v351 = vpop.permute.xlu0 %350
  %v352 = vsel %vm135, %v351, 0
  %354 = vmatprep.subr.mxu0 0.0
  %355 = vmatpush1.msra.mxu0 %v18
  %356 = vmatprep.subr.mxu0 0.0
  %357 = vmatpush1.msra.mxu0 %v19
  %358 = vmatprep.subr.mxu0 0.0
  %359 = vmatpush1.msra.mxu0 %v20
  %360 = vmatprep.subr.mxu0 0.0
  %361 = vmatpush1.msra.mxu0 %v21
  %362 = vmatprep.subr.mxu0 0.0
  %363 = vmatpush1.msra.mxu0 0.0
  %364 = vmatprep.subr.mxu0 0.0
  %365 = vmatpush1.msra.mxu0 0.0
  %366 = vmatprep.subr.mxu0 0.0
  %367 = vmatpush1.msra.mxu0 0.0
  %368 = vmatprep.subr.mxu0 0.0
  %369 = vmatpush1.msra.mxu0 0.0
  %370 = vmatprep.subr.mxu0 0.0
  %371 = vmatpush1.msra.mxu0 0.0
  %372 = vmatprep.subr.mxu0 0.0
  %373 = vmatpush1.msra.mxu0 0.0
  %374 = vmatprep.subr.mxu0 0.0
  %375 = vmatpush1.msra.mxu0 0.0
  %376 = vmatprep.subr.mxu0 0.0
  %377 = vmatpush1.msra.mxu0 0.0
  %378 = vmatprep.subr.mxu0 0.0
  %379 = vmatpush1.msra.mxu0 0.0
  %380 = vmatprep.subr.mxu0 0.0
  %381 = vmatpush1.msra.mxu0 0.0
  %382 = vmatprep.subr.mxu0 0.0
  %383 = vmatpush1.msra.mxu0 0.0
  %384 = vmatprep.subr.mxu0 0.0
  %385 = vmatpush1.msra.mxu0 0.0
  %386 = vmatprep.subr.mxu0 0.0
  %387 = vmatpush1.msra.mxu0 0.0
  %388 = vmatprep.subr.mxu0 0.0
  %389 = vmatpush1.msra.mxu0 0.0
  %390 = vmatprep.subr.mxu0 0.0
  %391 = vmatpush1.msra.mxu0 0.0
  %392 = vmatprep.subr.mxu0 0.0
  %393 = vmatpush1.msra.mxu0 0.0
  %394 = vmatprep.subr.mxu0 0.0
  %395 = vmatpush1.msra.mxu0 0.0
  %396 = vmatprep.subr.mxu0 0.0
  %397 = vmatpush1.msra.mxu0 0.0
  %398 = vmatprep.subr.mxu0 0.0
  %399 = vmatpush1.msra.mxu0 0.0
  %400 = vmatprep.subr.mxu0 0.0
  %401 = vmatpush1.msra.mxu0 0.0
  %402 = vmatprep.subr.mxu0 0.0
  %403 = vmatpush1.msra.mxu0 0.0
  %404 = vmatprep.subr.mxu0 0.0
  %405 = vmatpush1.msra.mxu0 0.0
  %406 = vmatprep.subr.mxu0 0.0
  %407 = vmatpush1.msra.mxu0 0.0
  %408 = vmatprep.subr.mxu0 0.0
  %409 = vmatpush1.msra.mxu0 0.0
  %410 = vmatprep.subr.mxu0 0.0
  %411 = vmatpush1.msra.mxu0 0.0
  %412 = vmatprep.subr.mxu0 0.0
  %413 = vmatpush1.msra.mxu0 0.0
  %414 = vmatprep.subr.mxu0 0.0
  %415 = vmatpush1.msra.mxu0 0.0
  %416 = vmatprep.subr.mxu0 0.0
  %417 = vmatpush1.msra.mxu0 0.0
  %418 = vmatprep.mubr.f32.mxu0 0.0
  %419 = vmatmul.mubr.f32.gmra.mrb[0].mxu0 %v352
  %v420 = vpop.f32.mrb[0].mxu0
  %v421 = vadd.f32 0.0, %v420
  %v422 = vpop.f32.mrb[0].mxu0
  %423 = vdwg.mxu0
  %v425 = vrot.slane %v421, 2
  %v427 = vadd.f32 %v99, %v425
  %v428 = vxor.u32 %v427, 2147483648
  %v429 = vmul.f32 %v428, 1.442695
  %v430 = vpow.pop %v429
  %v431 = vadd.f32 %v430, 1.0
  %v432 = vrcp.pop %v431
  %v433 = vmul.f32 1.0, %v432
  %v434 = vmul.f32 %v433, 2.0
  %v435 = vsub.f32 %v434, 1.0
  %v437 = vrot.slane %v341, 6
  %v439 = vmul.f32 %v433, %v437
  %441 = vrot.lane.b32.xlu0 %v435, 32
  %v442 = vpop.permute.xlu0 %441
  %v444 = vmul.f32 %v433, %v442
  %446 = vrot.lane.b32.xlu0 %v444, 32
  %v447 = vpop.permute.xlu0 %446
  %v449 = vadd.f32 %v439, %v447
  %v450 = vtanh.pop %v449
  %452 = vrot.lane.b32.xlu0 %v450, 32
  %v453 = vpop.permute.xlu0 %452
  %v455 = vmul.f32 %v433, %v453
  %v457 = vrot.slane %v455, 6
  %458 = vrot.lane.b32.xlu0 %v457, 64
  %v459 = vpop.permute.xlu0 %458
  %v460 = vsel %vm135, %v459, 0
  %462 = vmatprep.subr.mxu0 0.0
  %463 = vmatpush1.msra.mxu0 %v18
  %464 = vmatprep.subr.mxu0 0.0
  %465 = vmatpush1.msra.mxu0 %v19
  %466 = vmatprep.subr.mxu0 0.0
  %467 = vmatpush1.msra.mxu0 %v20
  %468 = vmatprep.subr.mxu0 0.0
  %469 = vmatpush1.msra.mxu0 %v21
  %470 = vmatprep.subr.mxu0 0.0
  %471 = vmatpush1.msra.mxu0 0.0
  %472 = vmatprep.subr.mxu0 0.0
  %473 = vmatpush1.msra.mxu0 0.0
  %474 = vmatprep.subr.mxu0 0.0
  %475 = vmatpush1.msra.mxu0 0.0
  %476 = vmatprep.subr.mxu0 0.0
  %477 = vmatpush1.msra.mxu0 0.0
  %478 = vmatprep.subr.mxu0 0.0
  %479 = vmatpush1.msra.mxu0 0.0
  %480 = vmatprep.subr.mxu0 0.0
  %481 = vmatpush1.msra.mxu0 0.0
  %482 = vmatprep.subr.mxu0 0.0
  %483 = vmatpush1.msra.mxu0 0.0
  %484 = vmatprep.subr.mxu0 0.0
  %485 = vmatpush1.msra.mxu0 0.0
  %486 = vmatprep.subr.mxu0 0.0
  %487 = vmatpush1.msra.mxu0 0.0
  %488 = vmatprep.subr.mxu0 0.0
  %489 = vmatpush1.msra.mxu0 0.0
  %490 = vmatprep.subr.mxu0 0.0
  %491 = vmatpush1.msra.mxu0 0.0
  %492 = vmatprep.subr.mxu0 0.0
  %493 = vmatpush1.msra.mxu0 0.0
  %494 = vmatprep.subr.mxu0 0.0
  %495 = vmatpush1.msra.mxu0 0.0
  %496 = vmatprep.subr.mxu0 0.0
  %497 = vmatpush1.msra.mxu0 0.0
  %498 = vmatprep.subr.mxu0 0.0
  %499 = vmatpush1.msra.mxu0 0.0
  %500 = vmatprep.subr.mxu0 0.0
  %501 = vmatpush1.msra.mxu0 0.0
  %502 = vmatprep.subr.mxu0 0.0
  %503 = vmatpush1.msra.mxu0 0.0
  %504 = vmatprep.subr.mxu0 0.0
  %505 = vmatpush1.msra.mxu0 0.0
  %506 = vmatprep.subr.mxu0 0.0
  %507 = vmatpush1.msra.mxu0 0.0
  %508 = vmatprep.subr.mxu0 0.0
  %509 = vmatpush1.msra.mxu0 0.0
  %510 = vmatprep.subr.mxu0 0.0
  %511 = vmatpush1.msra.mxu0 0.0
  %512 = vmatprep.subr.mxu0 0.0
  %513 = vmatpush1.msra.mxu0 0.0
  %514 = vmatprep.subr.mxu0 0.0
  %515 = vmatpush1.msra.mxu0 0.0
  %516 = vmatprep.subr.mxu0 0.0
  %517 = vmatpush1.msra.mxu0 0.0
  %518 = vmatprep.subr.mxu0 0.0
  %519 = vmatpush1.msra.mxu0 0.0
  %520 = vmatprep.subr.mxu0 0.0
  %521 = vmatpush1.msra.mxu0 0.0
  %522 = vmatprep.subr.mxu0 0.0
  %523 = vmatpush1.msra.mxu0 0.0
  %524 = vmatprep.subr.mxu0 0.0
  %525 = vmatpush1.msra.mxu0 0.0
  %526 = vmatprep.mubr.f32.mxu0 0.0
  %527 = vmatmul.mubr.f32.gmra.mrb[0].mxu0 %v460
  %v528 = vpop.f32.mrb[0].mxu0
  %v529 = vadd.f32 0.0, %v528
  %v530 = vpop.f32.mrb[0].mxu0
  %531 = vdwg.mxu0
  %v532 = vadd.f32 %v104, %v529
  %v533 = vxor.u32 %v532, 2147483648
  %v534 = vmul.f32 %v533, 1.442695
  %v535 = vpow.pop %v534
  %v536 = vadd.f32 %v535, 1.0
  %v537 = vrcp.pop %v536
  %v538 = vmul.f32 1.0, %v537
  %v539 = vmul.f32 %v538, 2.0
  %v540 = vsub.f32 %v539, 1.0
  %v542 = vrot.slane %v449, 6
  %v544 = vmul.f32 %v538, %v542
  %546 = vrot.lane.b32.xlu0 %v540, 32
  %v547 = vpop.permute.xlu0 %546
  %v549 = vmul.f32 %v538, %v547
  %551 = vrot.lane.b32.xlu0 %v549, 32
  %v552 = vpop.permute.xlu0 %551
  %v554 = vadd.f32 %v544, %v552
  %v555 = vtanh.pop %v554
  %557 = vrot.lane.b32.xlu0 %v555, 32
  %v558 = vpop.permute.xlu0 %557
  %v560 = vmul.f32 %v538, %v558
  %562 = vrot.lane.b32.xlu0 %v560, 64
  %v563 = vpop.permute.xlu0 %562
  %v564 = vsel %vm135, %v563, 0
  %566 = vmatprep.subr.mxu0 0.0
  %567 = vmatpush1.msra.mxu0 %v18
  %568 = vmatprep.subr.mxu0 0.0
  %569 = vmatpush1.msra.mxu0 %v19
  %570 = vmatprep.subr.mxu0 0.0
  %571 = vmatpush1.msra.mxu0 %v20
  %572 = vmatprep.subr.mxu0 0.0
  %573 = vmatpush1.msra.mxu0 %v21
  %574 = vmatprep.subr.mxu0 0.0
  %575 = vmatpush1.msra.mxu0 0.0
  %576 = vmatprep.subr.mxu0 0.0
  %577 = vmatpush1.msra.mxu0 0.0
  %578 = vmatprep.subr.mxu0 0.0
  %579 = vmatpush1.msra.mxu0 0.0
  %580 = vmatprep.subr.mxu0 0.0
  %581 = vmatpush1.msra.mxu0 0.0
  %582 = vmatprep.subr.mxu0 0.0
  %583 = vmatpush1.msra.mxu0 0.0
  %584 = vmatprep.subr.mxu0 0.0
  %585 = vmatpush1.msra.mxu0 0.0
  %586 = vmatprep.subr.mxu0 0.0
  %587 = vmatpush1.msra.mxu0 0.0
  %588 = vmatprep.subr.mxu0 0.0
  %589 = vmatpush1.msra.mxu0 0.0
  %590 = vmatprep.subr.mxu0 0.0
  %591 = vmatpush1.msra.mxu0 0.0
  %592 = vmatprep.subr.mxu0 0.0
  %593 = vmatpush1.msra.mxu0 0.0
  %594 = vmatprep.subr.mxu0 0.0
  %595 = vmatpush1.msra.mxu0 0.0
  %596 = vmatprep.subr.mxu0 0.0
  %597 = vmatpush1.msra.mxu0 0.0
  %598 = vmatprep.subr.mxu0 0.0
  %599 = vmatpush1.msra.mxu0 0.0
  %600 = vmatprep.subr.mxu0 0.0
  %601 = vmatpush1.msra.mxu0 0.0
  %602 = vmatprep.subr.mxu0 0.0
  %603 = vmatpush1.msra.mxu0 0.0
  %604 = vmatprep.subr.mxu0 0.0
  %605 = vmatpush1.msra.mxu0 0.0
  %606 = vmatprep.subr.mxu0 0.0
  %607 = vmatpush1.msra.mxu0 0.0
  %608 = vmatprep.subr.mxu0 0.0
  %609 = vmatpush1.msra.mxu0 0.0
  %610 = vmatprep.subr.mxu0 0.0
  %611 = vmatpush1.msra.mxu0 0.0
  %612 = vmatprep.subr.mxu0 0.0
  %613 = vmatpush1.msra.mxu0 0.0
  %614 = vmatprep.subr.mxu0 0.0
  %615 = vmatpush1.msra.mxu0 0.0
  %616 = vmatprep.subr.mxu0 0.0
  %617 = vmatpush1.msra.mxu0 0.0
  %618 = vmatprep.subr.mxu0 0.0
  %619 = vmatpush1.msra.mxu0 0.0
  %620 = vmatprep.subr.mxu0 0.0
  %621 = vmatpush1.msra.mxu0 0.0
  %622 = vmatprep.subr.mxu0 0.0
  %623 = vmatpush1.msra.mxu0 0.0
  %624 = vmatprep.subr.mxu0 0.0
  %625 = vmatpush1.msra.mxu0 0.0
  %626 = vmatprep.subr.mxu0 0.0
  %627 = vmatpush1.msra.mxu0 0.0
  %628 = vmatprep.subr.mxu0 0.0
  %629 = vmatpush1.msra.mxu0 0.0
  %630 = vmatprep.mubr.f32.mxu0 0.0
  %631 = vmatmul.mubr.f32.gmra.mrb[0].mxu0 %v564
  %v632 = vpop.f32.mrb[0].mxu0
  %v633 = vadd.f32 0.0, %v632
  %v634 = vpop.f32.mrb[0].mxu0
  %635 = vdwg.mxu0
  %v637 = vrot.slane %v633, 6
  %v639 = vadd.f32 %v104, %v637
  %v640 = vxor.u32 %v639, 2147483648
  %v641 = vmul.f32 %v640, 1.442695
  %v642 = vpow.pop %v641
  %v643 = vadd.f32 %v642, 1.0
  %v644 = vrcp.pop %v643
  %v645 = vmul.f32 1.0, %v644
  %v646 = vmul.f32 %v645, 2.0
  %v647 = vsub.f32 %v646, 1.0
  %v649 = vrot.slane %v554, 6
  %v651 = vmul.f32 %v645, %v649
  %653 = vrot.lane.b32.xlu0 %v647, 32
  %v654 = vpop.permute.xlu0 %653
  %v656 = vmul.f32 %v645, %v654
  %658 = vrot.lane.b32.xlu0 %v656, 32
  %v659 = vpop.permute.xlu0 %658
  %v661 = vadd.f32 %v651, %v659
  %v662 = vtanh.pop %v661
  %664 = vrot.lane.b32.xlu0 %v662, 32
  %v665 = vpop.permute.xlu0 %664
  %v667 = vmul.f32 %v645, %v665
  %v669 = vrot.slane %v667, 2
  %670 = vrot.lane.b32.xlu0 %v669, 64
  %v671 = vpop.permute.xlu0 %670
  %v672 = vsel %vm135, %v671, 0
  %674 = vmatprep.subr.mxu0 0.0
  %675 = vmatpush1.msra.mxu0 %v18
  %676 = vmatprep.subr.mxu0 0.0
  %677 = vmatpush1.msra.mxu0 %v19
  %678 = vmatprep.subr.mxu0 0.0
  %679 = vmatpush1.msra.mxu0 %v20
  %680 = vmatprep.subr.mxu0 0.0
  %681 = vmatpush1.msra.mxu0 %v21
  %682 = vmatprep.subr.mxu0 0.0
  %683 = vmatpush1.msra.mxu0 0.0
  %684 = vmatprep.subr.mxu0 0.0
  %685 = vmatpush1.msra.mxu0 0.0
  %686 = vmatprep.subr.mxu0 0.0
  %687 = vmatpush1.msra.mxu0 0.0
  %688 = vmatprep.subr.mxu0 0.0
  %689 = vmatpush1.msra.mxu0 0.0
  %690 = vmatprep.subr.mxu0 0.0
  %691 = vmatpush1.msra.mxu0 0.0
  %692 = vmatprep.subr.mxu0 0.0
  %693 = vmatpush1.msra.mxu0 0.0
  %694 = vmatprep.subr.mxu0 0.0
  %695 = vmatpush1.msra.mxu0 0.0
  %696 = vmatprep.subr.mxu0 0.0
  %697 = vmatpush1.msra.mxu0 0.0
  %698 = vmatprep.subr.mxu0 0.0
  %699 = vmatpush1.msra.mxu0 0.0
  %700 = vmatprep.subr.mxu0 0.0
  %701 = vmatpush1.msra.mxu0 0.0
  %702 = vmatprep.subr.mxu0 0.0
  %703 = vmatpush1.msra.mxu0 0.0
  %704 = vmatprep.subr.mxu0 0.0
  %705 = vmatpush1.msra.mxu0 0.0
  %706 = vmatprep.subr.mxu0 0.0
  %707 = vmatpush1.msra.mxu0 0.0
  %708 = vmatprep.subr.mxu0 0.0
  %709 = vmatpush1.msra.mxu0 0.0
  %710 = vmatprep.subr.mxu0 0.0
  %711 = vmatpush1.msra.mxu0 0.0
  %712 = vmatprep.subr.mxu0 0.0
  %713 = vmatpush1.msra.mxu0 0.0
  %714 = vmatprep.subr.mxu0 0.0
  %715 = vmatpush1.msra.mxu0 0.0
  %716 = vmatprep.subr.mxu0 0.0
  %717 = vmatpush1.msra.mxu0 0.0
  %718 = vmatprep.subr.mxu0 0.0
  %719 = vmatpush1.msra.mxu0 0.0
  %720 = vmatprep.subr.mxu0 0.0
  %721 = vmatpush1.msra.mxu0 0.0
  %722 = vmatprep.subr.mxu0 0.0
  %723 = vmatpush1.msra.mxu0 0.0
  %724 = vmatprep.subr.mxu0 0.0
  %725 = vmatpush1.msra.mxu0 0.0
  %726 = vmatprep.subr.mxu0 0.0
  %727 = vmatpush1.msra.mxu0 0.0
  %728 = vmatprep.subr.mxu0 0.0
  %729 = vmatpush1.msra.mxu0 0.0
  %730 = vmatprep.subr.mxu0 0.0
  %731 = vmatpush1.msra.mxu0 0.0
  %732 = vmatprep.subr.mxu0 0.0
  %733 = vmatpush1.msra.mxu0 0.0
  %734 = vmatprep.subr.mxu0 0.0
  %735 = vmatpush1.msra.mxu0 0.0
  %736 = vmatprep.subr.mxu0 0.0
  %737 = vmatpush1.msra.mxu0 0.0
  %738 = vmatprep.mubr.f32.mxu0 0.0
  %739 = vmatmul.mubr.f32.gmra.mrb[0].mxu0 %v672
  %v740 = vpop.f32.mrb[0].mxu0
  %v741 = vadd.f32 0.0, %v740
  %v742 = vpop.f32.mrb[0].mxu0
  %743 = vdwg.mxu0
  %v745 = vrot.slane %v741, 4
  %v747 = vadd.f32 %v104, %v745
  %v748 = vxor.u32 %v747, 2147483648
  %v749 = vmul.f32 %v748, 1.442695
  %v750 = vpow.pop %v749
  %v751 = vadd.f32 %v750, 1.0
  %v752 = vrcp.pop %v751
  %v753 = vmul.f32 1.0, %v752
  %v754 = vmul.f32 %v753, 2.0
  %v755 = vsub.f32 %v754, 1.0
  %v757 = vrot.slane %v661, 6
  %v759 = vmul.f32 %v753, %v757
  %761 = vrot.lane.b32.xlu0 %v755, 32
  %v762 = vpop.permute.xlu0 %761
  %v764 = vmul.f32 %v753, %v762
  %766 = vrot.lane.b32.xlu0 %v764, 32
  %v767 = vpop.permute.xlu0 %766
  %v769 = vadd.f32 %v759, %v767
  %v770 = vtanh.pop %v769
  %772 = vrot.lane.b32.xlu0 %v770, 32
  %v773 = vpop.permute.xlu0 %772
  %v775 = vmul.f32 %v753, %v773
  %v777 = vrot.slane %v775, 4
  %778 = vrot.lane.b32.xlu0 %v777, 64
  %v779 = vpop.permute.xlu0 %778
  %v780 = vsel %vm135, %v779, 0
  %782 = vmatprep.subr.mxu0 0.0
  %783 = vmatpush1.msra.mxu0 %v18
  %784 = vmatprep.subr.mxu0 0.0
  %785 = vmatpush1.msra.mxu0 %v19
  %786 = vmatprep.subr.mxu0 0.0
  %787 = vmatpush1.msra.mxu0 %v20
  %788 = vmatprep.subr.mxu0 0.0
  %789 = vmatpush1.msra.mxu0 %v21
  %790 = vmatprep.subr.mxu0 0.0
  %791 = vmatpush1.msra.mxu0 0.0
  %792 = vmatprep.subr.mxu0 0.0
  %793 = vmatpush1.msra.mxu0 0.0
  %794 = vmatprep.subr.mxu0 0.0
  %795 = vmatpush1.msra.mxu0 0.0
  %796 = vmatprep.subr.mxu0 0.0
  %797 = vmatpush1.msra.mxu0 0.0
  %798 = vmatprep.subr.mxu0 0.0
  %799 = vmatpush1.msra.mxu0 0.0
  %800 = vmatprep.subr.mxu0 0.0
  %801 = vmatpush1.msra.mxu0 0.0
  %802 = vmatprep.subr.mxu0 0.0
  %803 = vmatpush1.msra.mxu0 0.0
  %804 = vmatprep.subr.mxu0 0.0
  %805 = vmatpush1.msra.mxu0 0.0
  %806 = vmatprep.subr.mxu0 0.0
  %807 = vmatpush1.msra.mxu0 0.0
  %808 = vmatprep.subr.mxu0 0.0
  %809 = vmatpush1.msra.mxu0 0.0
  %810 = vmatprep.subr.mxu0 0.0
  %811 = vmatpush1.msra.mxu0 0.0
  %812 = vmatprep.subr.mxu0 0.0
  %813 = vmatpush1.msra.mxu0 0.0
  %814 = vmatprep.subr.mxu0 0.0
  %815 = vmatpush1.msra.mxu0 0.0
  %816 = vmatprep.subr.mxu0 0.0
  %817 = vmatpush1.msra.mxu0 0.0
  %818 = vmatprep.subr.mxu0 0.0
  %819 = vmatpush1.msra.mxu0 0.0
  %820 = vmatprep.subr.mxu0 0.0
  %821 = vmatpush1.msra.mxu0 0.0
  %822 = vmatprep.subr.mxu0 0.0
  %823 = vmatpush1.msra.mxu0 0.0
  %824 = vmatprep.subr.mxu0 0.0
  %825 = vmatpush1.msra.mxu0 0.0
  %826 = vmatprep.subr.mxu0 0.0
  %827 = vmatpush1.msra.mxu0 0.0
  %828 = vmatprep.subr.mxu0 0.0
  %829 = vmatpush1.msra.mxu0 0.0
  %830 = vmatprep.subr.mxu0 0.0
  %831 = vmatpush1.msra.mxu0 0.0
  %832 = vmatprep.subr.mxu0 0.0
  %833 = vmatpush1.msra.mxu0 0.0
  %834 = vmatprep.subr.mxu0 0.0
  %835 = vmatpush1.msra.mxu0 0.0
  %836 = vmatprep.subr.mxu0 0.0
  %837 = vmatpush1.msra.mxu0 0.0
  %838 = vmatprep.subr.mxu0 0.0
  %839 = vmatpush1.msra.mxu0 0.0
  %840 = vmatprep.subr.mxu0 0.0
  %841 = vmatpush1.msra.mxu0 0.0
  %842 = vmatprep.subr.mxu0 0.0
  %843 = vmatpush1.msra.mxu0 0.0
  %844 = vmatprep.subr.mxu0 0.0
  %845 = vmatpush1.msra.mxu0 0.0
  %846 = vmatprep.mubr.f32.mxu0 0.0
  %847 = vmatmul.mubr.f32.gmra.mrb[0].mxu0 %v780
  %v848 = vpop.f32.mrb[0].mxu0
  %v849 = vadd.f32 0.0, %v848
  %v850 = vpop.f32.mrb[0].mxu0
  %851 = vdwg.mxu0
  %v853 = vrot.slane %v849, 2
  %v855 = vadd.f32 %v104, %v853
  %v856 = vxor.u32 %v855, 2147483648
  %v857 = vmul.f32 %v856, 1.442695
  %v858 = vpow.pop %v857
  %v859 = vadd.f32 %v858, 1.0
  %v860 = vrcp.pop %v859
  %v861 = vmul.f32 1.0, %v860
  %v862 = vmul.f32 %v861, 2.0
  %v863 = vsub.f32 %v862, 1.0
  %v865 = vrot.slane %v769, 6
  %v867 = vmul.f32 %v861, %v865
  %869 = vrot.lane.b32.xlu0 %v863, 32
  %v870 = vpop.permute.xlu0 %869
  %v872 = vmul.f32 %v861, %v870
  %874 = vrot.lane.b32.xlu0 %v872, 32
  %v875 = vpop.permute.xlu0 %874
  %v877 = vadd.f32 %v867, %v875
  %v878 = vtanh.pop %v877
  %880 = vrot.lane.b32.xlu0 %v878, 32
  %v881 = vpop.permute.xlu0 %880
  %v883 = vmul.f32 %v861, %v881
  %v884 = vld [vmem:[%s2] sm:$0x1]
  %v886 = vlaneseq
  %v887 = vshrl.u32 %v886, 7
  %v888 = vsub.s32 0, %v887
  %v889 = vrot.slane %v884, %v888
  %890 = vrot.lane.b32.xlu0 %v889, 64
  %v891 = vpop.permute.xlu0 %890
  %v893 = vmul.f32 %v883, %v891
  %895 = vrot.lane.b32.xlu0 %v893, 64
  %v896 = vpop.permute.xlu0 %895
  %vm898 = vcmask 261126
  %v899 = vsel %vm898, %v896, 0.0
  %900 = vadd.xlane.f32.xlu0 %v899
  %v901 = vpop.xlane.xlu0 %900
  %s902 = sld [smem:[#allocation2]]
  %v903 = vstv %s902
  %v904 = vadd.f32 %v901, %v903
  %vm905 = vcmask 7174
  %906 = vst.msk [vmem:[%s4 - $0x6] sm:$0xc0] %vm905, %v904
  // Predicated region
  $region18: #{lstm_model_forward.1} parent=0 // pred_check
    _
  $region19: #{lstm_model_forward.1} parent=0 // pred_check_branch
    %908 = sbr.rel (0) target = $region21
  $region20: #{lstm_model_forward.1} parent=0 // pred_region
    _
  $region21: #{lstm_model_forward.1} parent=0 // pred_fallthru
    _
  // Predicated region
  $region22: #{lstm_model_forward.1} parent=0 // pred_check
    _
  $region23: #{lstm_model_forward.1} parent=0 // pred_check_branch
    %910 = sbr.rel (0) target = $region25
  $region24: #{lstm_model_forward.1} parent=0 // pred_region
    _
  $region25: #{lstm_model_forward.1} parent=0 // pred_fallthru
    _

</llo_original>
